<compile_context>
chip_gen: v6e
topology: v6e:2x2x1
jax: 0.10.0
libtpu: 0.0.40
codegen_flags: <defaults>
</compile_context>

<pallas_src>
import functools

import jax
import jax.numpy as jnp
import numpy as np
from jax.experimental import pallas as pl
from jax.experimental.pallas import tpu as pltpu

LANE = 128          # TPU lane width; hidden/output dims are zero-padded to this
DESIRED_TB = 1024   # target batch-tile rows (multiple of 8/128, VMEM-safe everywhere)


def _round_up(x, m):
    return (x + m - 1) // m * m


def _cdiv(a, b):
    return -(-a // b)


def _batch_tiling(batch, desired_tb=DESIRED_TB):
    """Pick (tile_rows, n_tiles) for the batch axis.

    - batch <= desired_tb: one block equal to the full batch (always a legal block).
    - otherwise: tiles of ~desired_tb rows (multiple of 8); tile count rounded up to
      an even number so v7x's two TensorCores both get work on the "parallel" axis.
      The last (partial) tile is handled by Pallas' masked boundary blocks.
    """
    if batch <= desired_tb:
        return batch, 1
    n_tiles = _cdiv(batch, desired_tb)
    if n_tiles % 2:
        n_tiles += 1
    tb = _round_up(_cdiv(batch, n_tiles), 8)
    return tb, _cdiv(batch, tb)


# ----------------------------- Pallas kernel --------------------------------
def mlp_actor_kernel(obs_ref, w1_ref, b1_ref, w2_ref, b2_ref, w3_ref, b3_ref,
                     logits_ref):
    """One batch tile of the MLP actor.

    obs_ref    : (TB, obs_dim)       f32 VMEM
    w*_ref     : (in_pad, out_pad)   f32 VMEM, (in, out) layout, zero-padded, lane-dense
    b*_ref     : (1, out_pad)        f32 VMEM
    logits_ref : (TB, out_pad=128)   f32  (first act_dim lanes are the real logits,
                                           padded lanes are exactly 0)
    Weights use a constant index_map, so they stay VMEM-resident across grid steps.
    """
    x = obs_ref[...]
    h1 = jnp.tanh(jnp.dot(x, w1_ref[...], preferred_element_type=jnp.float32)
                  + b1_ref[...])
    h2 = jnp.tanh(jnp.dot(h1, w2_ref[...], preferred_element_type=jnp.float32)
                  + b2_ref[...])
    # Lane-dense (TB, 128) unmasked store of the (zero-padded) logits.
    logits_ref[...] = (jnp.dot(h2, w3_ref[...], preferred_element_type=jnp.float32)
                       + b3_ref[...])


# ------------------------------ Wrapper --------------------------------------
@functools.partial(jax.jit, static_argnames=("act_dim", "deterministic"))
def mlp_actor_forward(obs, padded_params, key, act_dim, deterministic=True):
    (w1, b1), (w2, b2), (w3, b3) = padded_params
    batch, obs_dim = obs.shape
    out_pad = w3.shape[1]                         # 128-padded act_dim

    tb, n_tiles = _batch_tiling(batch)

    obs_spec = pl.BlockSpec((tb, obs_dim), lambda i: (i, 0))
    w_spec = lambda shp: pl.BlockSpec(shp, lambda i: (0, 0))   # invariant -> resident
    out_spec = pl.BlockSpec((tb, out_pad), lambda i: (i, 0))

    logits_p = pl.pallas_call(
        mlp_actor_kernel,
        out_shape=jax.ShapeDtypeStruct((batch, out_pad), jnp.float32),
        grid_spec=pltpu.PrefetchScalarGridSpec(
            num_scalar_prefetch=0,
            grid=(n_tiles,),
            in_specs=[
                obs_spec,
                w_spec(w1.shape), w_spec(b1.shape),
                w_spec(w2.shape), w_spec(b2.shape),
                w_spec(w3.shape), w_spec(b3.shape),
            ],
            out_specs=out_spec,
        ),
        compiler_params=pltpu.CompilerParams(
            dimension_semantics=("parallel",)),
    )(obs, w1, b1, w2, b2, w3, b3)

    logits = logits_p[:, :act_dim]
    if deterministic:
        action = jnp.argmax(logits, axis=-1).astype(jnp.int32)
    else:
        # Categorical(logits) sample; done on the tiny (batch, act_dim) slice.
        action = jax.random.categorical(key, logits, axis=-1).astype(jnp.int32)
    return action, logits


# ----------------------- Deterministic parameter init ------------------------
def orthogonal_init(key, out_features, in_features, gain):
    """Mimics torch.nn.init.orthogonal_ (QR of a random normal) with given gain."""
    rows, cols = out_features, in_features
    flat = jax.random.normal(key, (max(rows, cols), min(rows, cols)), jnp.float32)
    q, r = jnp.linalg.qr(flat)
    q = q * jnp.sign(jnp.diagonal(r))
    if rows < cols:
        q = q.T
    w = gain * q[:rows, :cols]          # torch layout (out, in)
    return w.T                          # stored transposed (in, out) for x @ W


def make_params(key, obs_dim, hidden_sizes, act_dim):
    sizes = [obs_dim] + list(hidden_sizes) + [act_dim]
    gains = [float(np.sqrt(2))] * len(hidden_sizes) + [0.01]
    keys = jax.random.split(key, len(gains))
    params = []
    for i, g in enumerate(gains):
        w = orthogonal_init(keys[i], sizes[i + 1], sizes[i], gain=g)
        b = jnp.zeros((1, sizes[i + 1]), jnp.float32)
        params.append((w, b))
    return params


def pad_params(params, lane=LANE):
    """Zero-pad each layer's output dim to a multiple of 128 lanes and each layer's
    input dim to the previous layer's padded output.  Exact: tanh(0)=0 and the
    padded weight rows/cols are zero, so results are unchanged."""
    padded = []
    in_pad = params[0][0].shape[0]      # obs_dim (K dim) is left unpadded
    for (w, b) in params:
        k_in, n_out = w.shape
        out_pad = _round_up(n_out, lane)
        w_p = jnp.zeros((in_pad, out_pad), jnp.float32).at[:k_in, :n_out].set(w)
        b_p = jnp.zeros((1, out_pad), jnp.float32).at[:, :n_out].set(b)
        padded.append((w_p, b_p))
        in_pad = out_pad
    return padded


# ------------------------------ Reference ------------------------------------
def reference_forward(obs, params):
    (w1, b1), (w2, b2), (w3, b3) = params
    h = jnp.tanh(obs @ w1 + b1)
    h = jnp.tanh(h @ w2 + b2)
    logits = h @ w3 + b3
    return jnp.argmax(logits, axis=-1).astype(jnp.int32), logits


if __name__ == "__main__":
    obs_dim, hidden_sizes, act_dim = 16, [32, 32], 6

    root = jax.random.PRNGKey(0)
    k_obs, k_params, k_sample, k_obs2 = jax.random.split(root, 4)

    params = make_params(k_params, obs_dim, hidden_sizes, act_dim)
    padded_params = pad_params(params)

    # ---- small batch (single tile), deterministic (greedy) ----
    obs = jax.random.normal(k_obs, (8, obs_dim), jnp.float32)
    act_det, logits = mlp_actor_forward(obs, padded_params, k_sample, act_dim,
                                        deterministic=True)
    act_det, logits = jax.block_until_ready((act_det, logits))

    ref_act, ref_logits = reference_forward(obs, params)
    logits_np, ref_np = np.asarray(logits), np.asarray(ref_logits)
    np.testing.assert_allclose(logits_np, ref_np, rtol=2e-2, atol=2e-3)
    # kernel action must be the argmax of the kernel's own logits
    np.testing.assert_array_equal(np.asarray(act_det), np.argmax(logits_np, -1))
    # and match the reference wherever the reference argmax is unambiguous
    srt = np.sort(ref_np, axis=-1)
    clear = (srt[:, -1] - srt[:, -2]) > 1e-2
    np.testing.assert_array_equal(np.asarray(act_det)[clear],
                                  np.asarray(ref_act)[clear])

    # ---- stochastic path: Categorical(logits) sampling on the sliced logits ----
    act_st, logits_st = mlp_actor_forward(obs, padded_params, k_sample, act_dim,
                                          deterministic=False)
    act_st, logits_st = jax.block_until_ready((act_st, logits_st))
    assert act_st.shape == (8,) and act_st.dtype == jnp.int32
    assert bool(jnp.all((act_st >= 0) & (act_st < act_dim)))
    np.testing.assert_allclose(np.asarray(logits_st), logits_np, rtol=1e-6, atol=1e-6)

    # ---- larger batch (not a multiple of 128; no obs padding needed) ----
    obs2 = jax.random.normal(k_obs2, (200, obs_dim), jnp.float32)
    act2, logits2 = mlp_actor_forward(obs2, padded_params, k_sample, act_dim,
                                      deterministic=True)
    act2, logits2 = jax.block_until_ready((act2, logits2))
    ref_act2, ref_logits2 = reference_forward(obs2, params)
    l2, r2 = np.asarray(logits2), np.asarray(ref_logits2)
    np.testing.assert_allclose(l2, r2, rtol=2e-2, atol=2e-3)
    np.testing.assert_array_equal(np.asarray(act2), np.argmax(l2, -1))
    srt2 = np.sort(r2, axis=-1)
    clear2 = (srt2[:, -1] - srt2[:, -2]) > 1e-2
    np.testing.assert_array_equal(np.asarray(act2)[clear2],
                                  np.asarray(ref_act2)[clear2])

    # TODO(synk): log_prob/entropy/KL helpers of MLPActorDiscrete stay as plain JAX
    # on the returned logits; only the MLP forward is a Pallas kernel.
    print("KERNEL_OK")
</pallas_src>

<mosaic_0001>
module attributes {stable_mosaic.version = 11 : i64} {
  func.func @mlp_actor_kernel(%arg0: i32, %arg1: memref<8x16xf32, #tpu.memory_space<vmem>>, %arg2: memref<16x128xf32, #tpu.memory_space<vmem>>, %arg3: memref<1x128xf32, #tpu.memory_space<vmem>>, %arg4: memref<128x128xf32, #tpu.memory_space<vmem>>, %arg5: memref<1x128xf32, #tpu.memory_space<vmem>>, %arg6: memref<128x128xf32, #tpu.memory_space<vmem>>, %arg7: memref<1x128xf32, #tpu.memory_space<vmem>>, %arg8: memref<8x128xf32, #tpu.memory_space<vmem>>) attributes {dimension_semantics = [#tpu.dimension_semantics<parallel>], iteration_bounds = array<i64: 1>, scalar_prefetch = 0 : i64, scratch_operands = 0 : i64, tpu.core_type = #tpu.core_type<tc>, window_params = [{transform_indices = @transform_0, window_bounds = array<i64: 8, 16>}, {pipeline_mode = #tpu.pipeline_mode<synchronous>, transform_indices = @transform_1, window_bounds = array<i64: 16, 128>}, {pipeline_mode = #tpu.pipeline_mode<synchronous>, transform_indices = @transform_2, window_bounds = array<i64: 1, 128>}, {pipeline_mode = #tpu.pipeline_mode<synchronous>, transform_indices = @transform_3, window_bounds = array<i64: 128, 128>}, {pipeline_mode = #tpu.pipeline_mode<synchronous>, transform_indices = @transform_4, window_bounds = array<i64: 1, 128>}, {pipeline_mode = #tpu.pipeline_mode<synchronous>, transform_indices = @transform_5, window_bounds = array<i64: 128, 128>}, {pipeline_mode = #tpu.pipeline_mode<synchronous>, transform_indices = @transform_6, window_bounds = array<i64: 1, 128>}, {transform_indices = @transform_7, window_bounds = array<i64: 8, 128>}]} {
    %c0 = arith.constant 0 : index
    %c0_0 = arith.constant 0 : index
    %0 = vector.load %arg1[%c0, %c0_0] : memref<8x16xf32, #tpu.memory_space<vmem>>, vector<8x16xf32>
    %c0_1 = arith.constant 0 : index
    %c0_2 = arith.constant 0 : index
    %1 = vector.load %arg2[%c0_1, %c0_2] : memref<16x128xf32, #tpu.memory_space<vmem>>, vector<16x128xf32>
    %cst = arith.constant dense<0.000000e+00> : vector<8x128xf32>
    %2 = tpu.matmul %0, %1, %cst {dimension_numbers = #tpu.dot_dimension_numbers<[1], [0], [0], [1], [0, 0, 1, 1], [], []>} : vector<8x16xf32>, vector<16x128xf32>, vector<8x128xf32> -> vector<8x128xf32>
    %c0_3 = arith.constant 0 : index
    %c0_4 = arith.constant 0 : index
    %3 = vector.load %arg3[%c0_3, %c0_4] : memref<1x128xf32, #tpu.memory_space<vmem>>, vector<1x128xf32>
    %4 = vector.broadcast %3 : vector<1x128xf32> to vector<8x128xf32>
    %5 = arith.addf %2, %4 : vector<8x128xf32>
    %6 = math.tanh %5 : vector<8x128xf32>
    %c0_5 = arith.constant 0 : index
    %c0_6 = arith.constant 0 : index
    %7 = vector.load %arg4[%c0_5, %c0_6] : memref<128x128xf32, #tpu.memory_space<vmem>>, vector<128x128xf32>
    %cst_7 = arith.constant dense<0.000000e+00> : vector<8x128xf32>
    %8 = tpu.matmul %6, %7, %cst_7 {dimension_numbers = #tpu.dot_dimension_numbers<[1], [0], [0], [1], [0, 0, 1, 1], [], []>} : vector<8x128xf32>, vector<128x128xf32>, vector<8x128xf32> -> vector<8x128xf32>
    %c0_8 = arith.constant 0 : index
    %c0_9 = arith.constant 0 : index
    %9 = vector.load %arg5[%c0_8, %c0_9] : memref<1x128xf32, #tpu.memory_space<vmem>>, vector<1x128xf32>
    %10 = vector.broadcast %9 : vector<1x128xf32> to vector<8x128xf32>
    %11 = arith.addf %8, %10 : vector<8x128xf32>
    %12 = math.tanh %11 : vector<8x128xf32>
    %c0_10 = arith.constant 0 : index
    %c0_11 = arith.constant 0 : index
    %13 = vector.load %arg6[%c0_10, %c0_11] : memref<128x128xf32, #tpu.memory_space<vmem>>, vector<128x128xf32>
    %cst_12 = arith.constant dense<0.000000e+00> : vector<8x128xf32>
    %14 = tpu.matmul %12, %13, %cst_12 {dimension_numbers = #tpu.dot_dimension_numbers<[1], [0], [0], [1], [0, 0, 1, 1], [], []>} : vector<8x128xf32>, vector<128x128xf32>, vector<8x128xf32> -> vector<8x128xf32>
    %c0_13 = arith.constant 0 : index
    %c0_14 = arith.constant 0 : index
    %15 = vector.load %arg7[%c0_13, %c0_14] : memref<1x128xf32, #tpu.memory_space<vmem>>, vector<1x128xf32>
    %16 = vector.broadcast %15 : vector<1x128xf32> to vector<8x128xf32>
    %17 = arith.addf %14, %16 : vector<8x128xf32>
    %c0_15 = arith.constant 0 : index
    %c0_16 = arith.constant 0 : index
    %18 = vector.load %arg8[%c0_15, %c0_16] : memref<8x128xf32, #tpu.memory_space<vmem>>, vector<8x128xf32>
    tpu.vector_store %arg8[%c0_15, %c0_16], %17 {strides = array<i32>} : memref<8x128xf32, #tpu.memory_space<vmem>>, vector<8x128xf32>,
    return
  }
  func.func @transform_0(%arg0: i32) -> (i32, i32) {
    %c0_i32 = arith.constant 0 : i32
    %c0_i32_0 = arith.constant 0 : i32
    return %arg0, %c0_i32 : i32, i32
  }
  func.func @transform_1(%arg0: i32) -> (i32, i32) {
    %c0_i32 = arith.constant 0 : i32
    %c0_i32_0 = arith.constant 0 : i32
    %c0_i32_1 = arith.constant 0 : i32
    return %c0_i32, %c0_i32_0 : i32, i32
  }
  func.func @transform_2(%arg0: i32) -> (i32, i32) {
    %c0_i32 = arith.constant 0 : i32
    %c0_i32_0 = arith.constant 0 : i32
    %c0_i32_1 = arith.constant 0 : i32
    return %c0_i32, %c0_i32_0 : i32, i32
  }
  func.func @transform_3(%arg0: i32) -> (i32, i32) {
    %c0_i32 = arith.constant 0 : i32
    %c0_i32_0 = arith.constant 0 : i32
    %c0_i32_1 = arith.constant 0 : i32
    return %c0_i32, %c0_i32_0 : i32, i32
  }
  func.func @transform_4(%arg0: i32) -> (i32, i32) {
    %c0_i32 = arith.constant 0 : i32
    %c0_i32_0 = arith.constant 0 : i32
    %c0_i32_1 = arith.constant 0 : i32
    return %c0_i32, %c0_i32_0 : i32, i32
  }
  func.func @transform_5(%arg0: i32) -> (i32, i32) {
    %c0_i32 = arith.constant 0 : i32
    %c0_i32_0 = arith.constant 0 : i32
    %c0_i32_1 = arith.constant 0 : i32
    return %c0_i32, %c0_i32_0 : i32, i32
  }
  func.func @transform_6(%arg0: i32) -> (i32, i32) {
    %c0_i32 = arith.constant 0 : i32
    %c0_i32_0 = arith.constant 0 : i32
    %c0_i32_1 = arith.constant 0 : i32
    return %c0_i32, %c0_i32_0 : i32, i32
  }
  func.func @transform_7(%arg0: i32) -> (i32, i32) {
    %c0_i32 = arith.constant 0 : i32
    %c0_i32_0 = arith.constant 0 : i32
    return %arg0, %c0_i32 : i32, i32
  }
}

</mosaic_0001>

<llo_original>
// kernel: mlp_actor_forward.1
$region0: #{mlp_actor_forward.1}
  #allocation0 [shape = 'u32[]', space=smem, size = 0x4, offset = 0x4, fixed_abs, tag = 'smem constant byte address 0x4 - core index']
  #allocation1 [shape = 'u32[144,128]{1,0:T(1,128)}', space=vmem, size = 0x12000, scoped, tag = 'internal scratch']
  %s0 = inlined_call_operand.hbm [shape: f32[8,16], index: 0, kind: input, shape index: {}]
  %s1 = inlined_call_operand.hbm [shape: f32[16,128], index: 1, kind: input, shape index: {}]
  %s2 = inlined_call_operand.vmem [shape: f32[1,128], index: 2, kind: input, shape index: {}]
  %s3 = inlined_call_operand.hbm [shape: f32[128,128], index: 3, kind: input, shape index: {}]
  %s4 = inlined_call_operand.vmem [shape: f32[1,128], index: 4, kind: input, shape index: {}]
  %s5 = inlined_call_operand.hbm [shape: f32[128,128], index: 5, kind: input, shape index: {}]
  %s6 = inlined_call_operand.vmem [shape: f32[1,128], index: 6, kind: input, shape index: {}]
  %s7 = inlined_call_operand.vmem [shape: f32[8,128], index: 7, kind: output, shape index: {}]
  %s8 = sld [smem:[#allocation0]]
  $region54: #{mlp_actor_forward.1} parent=0
    _
  %s10 = ssub.s32 1, %s8
  %s11 = scalar_select 0, %s10, %s8
  $region1: #{mlp_actor_forward.1} parent=0
    #allocation2 [shape = 'u8[4096]{0}', space=vmem, size = 0x1000, scoped, tag = 'input window, operand 0, single buffered']
    #allocation3 [shape = 's32[1]{0}', space=sflag, size = 0x4, scoped, tag = 'scoped memory for mlp_actor_forward.1']
    #allocation4 [shape = 'u8[8192]{0}', space=vmem, size = 0x2000, scoped, tag = 'input window, operand 1, single buffered']
    #allocation5 [shape = 's32[1]{0}', space=sflag, size = 0x4, scoped, tag = 'scoped memory for mlp_actor_forward.1']
    #allocation6 [shape = 'u8[65536]{0}', space=vmem, size = 0x10000, scoped, tag = 'input window, operand 3, single buffered']
    #allocation7 [shape = 'u8[65536]{0}', space=vmem, size = 0x10000, scoped, tag = 'input window, operand 5, single buffered']
    #allocation8 [shape = 's32[1]{0}', space=sflag, size = 0x4, scoped, tag = 'scoped memory for mlp_actor_forward.1']
    %12 = vsyncpa [#allocation3], 0
    %13 = vsyncpa [#allocation5], 0
    %14 = vsyncpa [#allocation8], 0
    // Predicated region
    $region2: #{mlp_actor_forward.1} parent=1 // pred_check
      _
    $region3: #{mlp_actor_forward.1} parent=1 // pred_check_branch
      %16 = sbr.rel (0) target = $region5
    $region4: #{mlp_actor_forward.1} parent=1 // pred_region
      %s18 = ssub.s32 128, 128
      %19 = vsyncadd [#allocation3], %s18
      %s21 = sshll.u32 [#allocation2], 4
      %s22 = int_to_ptr.vmem [resolvable:$true] %s21
      %24 = dma.hbm_to_vmem [thread:$0]  %s0, 128, %s22, [#allocation3]
    $region5: #{mlp_actor_forward.1} parent=1 // pred_fallthru
      _
    // Predicated region
    $region6: #{mlp_actor_forward.1} parent=1 // pred_check
      _
    $region7: #{mlp_actor_forward.1} parent=1 // pred_check_branch
      %26 = sbr.rel (0) target = $region9
    $region8: #{mlp_actor_forward.1} parent=1 // pred_region
      %s28 = ssub.s32 256, 256
      %29 = vsyncadd [#allocation5], %s28
      %s30 = sshll.u32 [#allocation4], 4
      %s31 = int_to_ptr.vmem [resolvable:$true] %s30
      %36 = dma.hbm_to_vmem [thread:$0]  %s1, 256, %s31, [#allocation5], 128, 128, 8
    $region9: #{mlp_actor_forward.1} parent=1 // pred_fallthru
      _
    // Predicated region
    $region10: #{mlp_actor_forward.1} parent=1 // pred_check
      _
    $region11: #{mlp_actor_forward.1} parent=1 // pred_check_branch
      %38 = sbr.rel (0) target = $region13
    $region12: #{mlp_actor_forward.1} parent=1 // pred_region
      _
    $region13: #{mlp_actor_forward.1} parent=1 // pred_fallthru
      _
    // Predicated region
    $region14: #{mlp_actor_forward.1} parent=1 // pred_check
      _
    $region15: #{mlp_actor_forward.1} parent=1 // pred_check_branch
      %40 = sbr.rel (0) target = $region17
    $region16: #{mlp_actor_forward.1} parent=1 // pred_region
      %s42 = ssub.s32 2048, 2048
      %43 = vsyncadd [#allocation5], %s42
      %s44 = sshll.u32 [#allocation6], 4
      %s45 = int_to_ptr.vmem [resolvable:$true] %s44
      %50 = dma.hbm_to_vmem [thread:$0]  %s3, 2048, %s45, [#allocation5], 128, 128, 8
    $region17: #{mlp_actor_forward.1} parent=1 // pred_fallthru
      _
    // Predicated region
    $region18: #{mlp_actor_forward.1} parent=1 // pred_check
      _
    $region19: #{mlp_actor_forward.1} parent=1 // pred_check_branch
      %52 = sbr.rel (0) target = $region21
    $region20: #{mlp_actor_forward.1} parent=1 // pred_region
      _
    $region21: #{mlp_actor_forward.1} parent=1 // pred_fallthru
      _
    // Predicated region
    $region22: #{mlp_actor_forward.1} parent=1 // pred_check
      _
    $region23: #{mlp_actor_forward.1} parent=1 // pred_check_branch
      %54 = sbr.rel (0) target = $region25
    $region24: #{mlp_actor_forward.1} parent=1 // pred_region
      %s56 = ssub.s32 2048, 2048
      %57 = vsyncadd [#allocation8], %s56
      %s58 = sshll.u32 [#allocation7], 4
      %s59 = int_to_ptr.vmem [resolvable:$true] %s58
      %64 = dma.hbm_to_vmem [thread:$0]  %s5, 2048, %s59, [#allocation8], 128, 128, 8
    $region25: #{mlp_actor_forward.1} parent=1 // pred_fallthru
      _
    // Predicated region
    $region26: #{mlp_actor_forward.1} parent=1 // pred_check
      _
    $region27: #{mlp_actor_forward.1} parent=1 // pred_check_branch
      %66 = sbr.rel (0) target = $region29
    $region28: #{mlp_actor_forward.1} parent=1 // pred_region
      _
    $region29: #{mlp_actor_forward.1} parent=1 // pred_fallthru
      _
    // Predicated region
    $region30: #{mlp_actor_forward.1} parent=1 // pred_check
      _
    $region31: #{mlp_actor_forward.1} parent=1 // pred_check_branch
      %68 = sbr.rel (0) target = $region33
    $region32: #{mlp_actor_forward.1} parent=1 // pred_region
      %69 = dma.done [#allocation3], 128
    $region33: #{mlp_actor_forward.1} parent=1 // pred_fallthru
      _
    // Predicated region
    $region34: #{mlp_actor_forward.1} parent=1 // pred_check
      _
    $region35: #{mlp_actor_forward.1} parent=1 // pred_check_branch
      %71 = sbr.rel (0) target = $region37
    $region36: #{mlp_actor_forward.1} parent=1 // pred_region
      %72 = dma.done [#allocation5], 256
    $region37: #{mlp_actor_forward.1} parent=1 // pred_fallthru
      _
    // Predicated region
    $region38: #{mlp_actor_forward.1} parent=1 // pred_check
      _
    $region39: #{mlp_actor_forward.1} parent=1 // pred_check_branch
      %74 = sbr.rel (0) target = $region41
    $region40: #{mlp_actor_forward.1} parent=1 // pred_region
      %75 = dma.done [#allocation5], 2048
    $region41: #{mlp_actor_forward.1} parent=1 // pred_fallthru
      _
    // Predicated region
    $region42: #{mlp_actor_forward.1} parent=1 // pred_check
      _
    $region43: #{mlp_actor_forward.1} parent=1 // pred_check_branch
      %77 = sbr.rel (0) target = $region45
    $region44: #{mlp_actor_forward.1} parent=1 // pred_region
      %78 = dma.done [#allocation8], 2048
    $region45: #{mlp_actor_forward.1} parent=1 // pred_fallthru
      _
    %v79 = vld [vmem:[#allocation2] sm:$0xff]
    %v80 = vld [vmem:[#allocation4] sm:$0xff]
    %v81 = vld [vmem:[#allocation4 + $0x8] sm:$0xff]
    %v82 = vld [vmem:[%s2] sm:$0x1]
    %v84 = vlaneseq
    %v85 = vshrl.u32 %v84, 7
    %v86 = vsub.s32 0, %v85
    %v87 = vrot.slane %v82, %v86
    %vm89 = vcmask 130048
    %v91 = vsel %vm89, %v79, 0
    %93 = vmatprep.subr.mxu0 0.0
    %94 = vmatpush1.msra.mxu0 0.0
    %95 = vmatprep.subr.mxu0 0.0
    %96 = vmatpush1.msra.mxu0 0.0
    %97 = vmatprep.subr.mxu0 0.0
    %98 = vmatpush1.msra.mxu0 0.0
    %99 = vmatprep.subr.mxu0 0.0
    %100 = vmatpush1.msra.mxu0 0.0
    %101 = vmatprep.subr.mxu0 0.0
    %102 = vmatpush1.msra.mxu0 0.0
    %103 = vmatprep.subr.mxu0 0.0
    %104 = vmatpush1.msra.mxu0 0.0
    %105 = vmatprep.subr.mxu0 0.0
    %106 = vmatpush1.msra.mxu0 0.0
    %107 = vmatprep.subr.mxu0 0.0
    %108 = vmatpush1.msra.mxu0 0.0
    %109 = vmatprep.subr.mxu0 0.0
    %110 = vmatpush1.msra.mxu0 0.0
    %111 = vmatprep.subr.mxu0 0.0
    %112 = vmatpush1.msra.mxu0 0.0
    %113 = vmatprep.subr.mxu0 0.0
    %114 = vmatpush1.msra.mxu0 0.0
    %115 = vmatprep.subr.mxu0 0.0
    %116 = vmatpush1.msra.mxu0 0.0
    %117 = vmatprep.subr.mxu0 0.0
    %118 = vmatpush1.msra.mxu0 0.0
    %119 = vmatprep.subr.mxu0 0.0
    %120 = vmatpush1.msra.mxu0 0.0
    %121 = vmatprep.subr.mxu0 0.0
    %122 = vmatpush1.msra.mxu0 %v81
    %123 = vmatprep.subr.mxu0 0.0
    %124 = vmatpush1.msra.mxu0 %v80
    %125 = vmatprep.subr.mxu0 0.0
    %126 = vmatpush2.msra.mxu0 0.0
    %127 = vmatprep.subr.mxu0 0.0
    %128 = vmatpush2.msra.mxu0 0.0
    %129 = vmatprep.subr.mxu0 0.0
    %130 = vmatpush2.msra.mxu0 0.0
    %131 = vmatprep.subr.mxu0 0.0
    %132 = vmatpush2.msra.mxu0 0.0
    %133 = vmatprep.subr.mxu0 0.0
    %134 = vmatpush2.msra.mxu0 0.0
    %135 = vmatprep.subr.mxu0 0.0
    %136 = vmatpush2.msra.mxu0 0.0
    %137 = vmatprep.subr.mxu0 0.0
    %138 = vmatpush2.msra.mxu0 0.0
    %139 = vmatprep.subr.mxu0 0.0
    %140 = vmatpush2.msra.mxu0 0.0
    %141 = vmatprep.subr.mxu0 0.0
    %142 = vmatpush2.msra.mxu0 0.0
    %143 = vmatprep.subr.mxu0 0.0
    %144 = vmatpush2.msra.mxu0 0.0
    %145 = vmatprep.subr.mxu0 0.0
    %146 = vmatpush2.msra.mxu0 0.0
    %147 = vmatprep.subr.mxu0 0.0
    %148 = vmatpush2.msra.mxu0 0.0
    %149 = vmatprep.subr.mxu0 0.0
    %150 = vmatpush2.msra.mxu0 0.0
    %151 = vmatprep.subr.mxu0 0.0
    %152 = vmatpush2.msra.mxu0 0.0
    %153 = vmatprep.subr.mxu0 0.0
    %154 = vmatpush2.msra.mxu0 0.0
    %155 = vmatprep.subr.mxu0 0.0
    %156 = vmatpush2.msra.mxu0 0.0
    %157 = vmatprep.mubr.f32.mxu0 0.0
    %158 = vmatmul.mubr.f32.gmra.mxu0 %v91
    %v159 = vpop.f32.mrf.mxu0
    %v160 = vadd.f32 %v87, %v159
    %v161 = vpop.f32.mrf.mxu0
    %162 = vdwg.mxu0
    %v163 = vtanh.pop %v160
    %v164 = vld [vmem:[#allocation6] sm:$0xff]
    %v165 = vld [vmem:[#allocation6 + $0x8] sm:$0xff]
    %v166 = vld [vmem:[#allocation6 + $0x10] sm:$0xff]
    %v167 = vld [vmem:[#allocation6 + $0x18] sm:$0xff]
    %v168 = vld [vmem:[#allocation6 + $0x20] sm:$0xff]
    %v169 = vld [vmem:[#allocation6 + $0x28] sm:$0xff]
    %v170 = vld [vmem:[#allocation6 + $0x30] sm:$0xff]
    %v171 = vld [vmem:[#allocation6 + $0x38] sm:$0xff]
    %v172 = vld [vmem:[#allocation6 + $0x40] sm:$0xff]
    %v173 = vld [vmem:[#allocation6 + $0x48] sm:$0xff]
    %v174 = vld [vmem:[#allocation6 + $0x50] sm:$0xff]
    %v175 = vld [vmem:[#allocation6 + $0x58] sm:$0xff]
    %v176 = vld [vmem:[#allocation6 + $0x60] sm:$0xff]
    %v177 = vld [vmem:[#allocation6 + $0x68] sm:$0xff]
    %v178 = vld [vmem:[#allocation6 + $0x70] sm:$0xff]
    %v179 = vld [vmem:[#allocation6 + $0x78] sm:$0xff]
    %v180 = vld [vmem:[%s4] sm:$0x1]
    %v182 = vlaneseq
    %v183 = vshrl.u32 %v182, 7
    %v184 = vsub.s32 0, %v183
    %v185 = vrot.slane %v180, %v184
    %187 = vmatprep.subr.mxu0 0.0
    %188 = vmatpush1.msra.mxu0 %v179
    %189 = vmatprep.subr.mxu0 0.0
    %190 = vmatpush1.msra.mxu0 %v178
    %191 = vmatprep.subr.mxu0 0.0
    %192 = vmatpush1.msra.mxu0 %v177
    %193 = vmatprep.subr.mxu0 0.0
    %194 = vmatpush1.msra.mxu0 %v176
    %195 = vmatprep.subr.mxu0 0.0
    %196 = vmatpush1.msra.mxu0 %v175
    %197 = vmatprep.subr.mxu0 0.0
    %198 = vmatpush1.msra.mxu0 %v174
    %199 = vmatprep.subr.mxu0 0.0
    %200 = vmatpush1.msra.mxu0 %v173
    %201 = vmatprep.subr.mxu0 0.0
    %202 = vmatpush1.msra.mxu0 %v172
    %203 = vmatprep.subr.mxu0 0.0
    %204 = vmatpush1.msra.mxu0 %v171
    %205 = vmatprep.subr.mxu0 0.0
    %206 = vmatpush1.msra.mxu0 %v170
    %207 = vmatprep.subr.mxu0 0.0
    %208 = vmatpush1.msra.mxu0 %v169
    %209 = vmatprep.subr.mxu0 0.0
    %210 = vmatpush1.msra.mxu0 %v168
    %211 = vmatprep.subr.mxu0 0.0
    %212 = vmatpush1.msra.mxu0 %v167
    %213 = vmatprep.subr.mxu0 0.0
    %214 = vmatpush1.msra.mxu0 %v166
    %215 = vmatprep.subr.mxu0 0.0
    %216 = vmatpush1.msra.mxu0 %v165
    %217 = vmatprep.subr.mxu0 0.0
    %218 = vmatpush1.msra.mxu0 %v164
    %219 = vmatprep.subr.mxu0 0.0
    %220 = vmatpush2.msra.mxu0 0.0
    %221 = vmatprep.subr.mxu0 0.0
    %222 = vmatpush2.msra.mxu0 0.0
    %223 = vmatprep.subr.mxu0 0.0
    %224 = vmatpush2.msra.mxu0 0.0
    %225 = vmatprep.subr.mxu0 0.0
    %226 = vmatpush2.msra.mxu0 0.0
    %227 = vmatprep.subr.mxu0 0.0
    %228 = vmatpush2.msra.mxu0 0.0
    %229 = vmatprep.subr.mxu0 0.0
    %230 = vmatpush2.msra.mxu0 0.0
    %231 = vmatprep.subr.mxu0 0.0
    %232 = vmatpush2.msra.mxu0 0.0
    %233 = vmatprep.subr.mxu0 0.0
    %234 = vmatpush2.msra.mxu0 0.0
    %235 = vmatprep.subr.mxu0 0.0
    %236 = vmatpush2.msra.mxu0 0.0
    %237 = vmatprep.subr.mxu0 0.0
    %238 = vmatpush2.msra.mxu0 0.0
    %239 = vmatprep.subr.mxu0 0.0
    %240 = vmatpush2.msra.mxu0 0.0
    %241 = vmatprep.subr.mxu0 0.0
    %242 = vmatpush2.msra.mxu0 0.0
    %243 = vmatprep.subr.mxu0 0.0
    %244 = vmatpush2.msra.mxu0 0.0
    %245 = vmatprep.subr.mxu0 0.0
    %246 = vmatpush2.msra.mxu0 0.0
    %247 = vmatprep.subr.mxu0 0.0
    %248 = vmatpush2.msra.mxu0 0.0
    %249 = vmatprep.subr.mxu0 0.0
    %250 = vmatpush2.msra.mxu0 0.0
    %251 = vmatprep.mubr.f32.mxu0 0.0
    %252 = vmatmul.mubr.f32.gmra.mxu0 %v163
    %v253 = vpop.f32.mrf.mxu0
    %v254 = vadd.f32 %v185, %v253
    %v255 = vpop.f32.mrf.mxu0
    %256 = vdwg.mxu0
    %v257 = vtanh.pop %v254
    %v258 = vld [vmem:[#allocation7] sm:$0xff]
    %v259 = vld [vmem:[#allocation7 + $0x8] sm:$0xff]
    %v260 = vld [vmem:[#allocation7 + $0x10] sm:$0xff]
    %v261 = vld [vmem:[#allocation7 + $0x18] sm:$0xff]
    %v262 = vld [vmem:[#allocation7 + $0x20] sm:$0xff]
    %v263 = vld [vmem:[#allocation7 + $0x28] sm:$0xff]
    %v264 = vld [vmem:[#allocation7 + $0x30] sm:$0xff]
    %v265 = vld [vmem:[#allocation7 + $0x38] sm:$0xff]
    %v266 = vld [vmem:[#allocation7 + $0x40] sm:$0xff]
    %v267 = vld [vmem:[#allocation7 + $0x48] sm:$0xff]
    %v268 = vld [vmem:[#allocation7 + $0x50] sm:$0xff]
    %v269 = vld [vmem:[#allocation7 + $0x58] sm:$0xff]
    %v270 = vld [vmem:[#allocation7 + $0x60] sm:$0xff]
    %v271 = vld [vmem:[#allocation7 + $0x68] sm:$0xff]
    %v272 = vld [vmem:[#allocation7 + $0x70] sm:$0xff]
    %v273 = vld [vmem:[#allocation7 + $0x78] sm:$0xff]
    %v274 = vld [vmem:[%s6] sm:$0x1]
    %v276 = vlaneseq
    %v277 = vshrl.u32 %v276, 7
    %v278 = vsub.s32 0, %v277
    %v279 = vrot.slane %v274, %v278
    %281 = vmatprep.subr.mxu0 0.0
    %282 = vmatpush1.msra.mxu0 %v273
    %283 = vmatprep.subr.mxu0 0.0
    %284 = vmatpush1.msra.mxu0 %v272
    %285 = vmatprep.subr.mxu0 0.0
    %286 = vmatpush1.msra.mxu0 %v271
    %287 = vmatprep.subr.mxu0 0.0
    %288 = vmatpush1.msra.mxu0 %v270
    %289 = vmatprep.subr.mxu0 0.0
    %290 = vmatpush1.msra.mxu0 %v269
    %291 = vmatprep.subr.mxu0 0.0
    %292 = vmatpush1.msra.mxu0 %v268
    %293 = vmatprep.subr.mxu0 0.0
    %294 = vmatpush1.msra.mxu0 %v267
    %295 = vmatprep.subr.mxu0 0.0
    %296 = vmatpush1.msra.mxu0 %v266
    %297 = vmatprep.subr.mxu0 0.0
    %298 = vmatpush1.msra.mxu0 %v265
    %299 = vmatprep.subr.mxu0 0.0
    %300 = vmatpush1.msra.mxu0 %v264
    %301 = vmatprep.subr.mxu0 0.0
    %302 = vmatpush1.msra.mxu0 %v263
    %303 = vmatprep.subr.mxu0 0.0
    %304 = vmatpush1.msra.mxu0 %v262
    %305 = vmatprep.subr.mxu0 0.0
    %306 = vmatpush1.msra.mxu0 %v261
    %307 = vmatprep.subr.mxu0 0.0
    %308 = vmatpush1.msra.mxu0 %v260
    %309 = vmatprep.subr.mxu0 0.0
    %310 = vmatpush1.msra.mxu0 %v259
    %311 = vmatprep.subr.mxu0 0.0
    %312 = vmatpush1.msra.mxu0 %v258
    %313 = vmatprep.subr.mxu0 0.0
    %314 = vmatpush2.msra.mxu0 0.0
    %315 = vmatprep.subr.mxu0 0.0
    %316 = vmatpush2.msra.mxu0 0.0
    %317 = vmatprep.subr.mxu0 0.0
    %318 = vmatpush2.msra.mxu0 0.0
    %319 = vmatprep.subr.mxu0 0.0
    %320 = vmatpush2.msra.mxu0 0.0
    %321 = vmatprep.subr.mxu0 0.0
    %322 = vmatpush2.msra.mxu0 0.0
    %323 = vmatprep.subr.mxu0 0.0
    %324 = vmatpush2.msra.mxu0 0.0
    %325 = vmatprep.subr.mxu0 0.0
    %326 = vmatpush2.msra.mxu0 0.0
    %327 = vmatprep.subr.mxu0 0.0
    %328 = vmatpush2.msra.mxu0 0.0
    %329 = vmatprep.subr.mxu0 0.0
    %330 = vmatpush2.msra.mxu0 0.0
    %331 = vmatprep.subr.mxu0 0.0
    %332 = vmatpush2.msra.mxu0 0.0
    %333 = vmatprep.subr.mxu0 0.0
    %334 = vmatpush2.msra.mxu0 0.0
    %335 = vmatprep.subr.mxu0 0.0
    %336 = vmatpush2.msra.mxu0 0.0
    %337 = vmatprep.subr.mxu0 0.0
    %338 = vmatpush2.msra.mxu0 0.0
    %339 = vmatprep.subr.mxu0 0.0
    %340 = vmatpush2.msra.mxu0 0.0
    %341 = vmatprep.subr.mxu0 0.0
    %342 = vmatpush2.msra.mxu0 0.0
    %343 = vmatprep.subr.mxu0 0.0
    %344 = vmatpush2.msra.mxu0 0.0
    %345 = vmatprep.mubr.f32.mxu0 0.0
    %346 = vmatmul.mubr.f32.gmra.mxu0 %v257
    %v347 = vpop.f32.mrf.mxu0
    %v348 = vadd.f32 %v279, %v347
    %v349 = vpop.f32.mrf.mxu0
    %350 = vdwg.mxu0
    %351 = vst [vmem:[%s7] sm:$0xff] %v348
    // Predicated region
    $region46: #{mlp_actor_forward.1} parent=1 // pred_check
      _
    $region47: #{mlp_actor_forward.1} parent=1 // pred_check_branch
      %353 = sbr.rel (0) target = $region49
    $region48: #{mlp_actor_forward.1} parent=1 // pred_region
      _
    $region49: #{mlp_actor_forward.1} parent=1 // pred_fallthru
      _
    // Predicated region
    $region50: #{mlp_actor_forward.1} parent=1 // pred_check
      _
    $region51: #{mlp_actor_forward.1} parent=1 // pred_check_branch
      %355 = sbr.rel (0) target = $region53
    $region52: #{mlp_actor_forward.1} parent=1 // pred_region
      _
    $region53: #{mlp_actor_forward.1} parent=1 // pred_fallthru
      _
    %356 = vsyncpa [#allocation3], 1
    %357 = vsyncpa [#allocation5], 1
    %358 = vsyncpa [#allocation8], 1

</llo_original>
